<compile_context>
chip_gen: v5e
topology: v5e:2x2
jax: 0.10.0
libtpu: 0.0.40
codegen_flags: <defaults>
</compile_context>

<pallas_src>
import jax
import jax.numpy as jnp
import numpy as np
from jax.experimental import pallas as pl
from jax.experimental.pallas import tpu as pltpu

# Logical sizes (match the PyTorch module) and their 128-aligned padded sizes.
H1, H2 = 400, 300
H1_PAD, H2_PAD, OUT_PAD = 512, 384, 128


def _round_up(x, m):
    return ((x + m - 1) // m) * m


def actor_kernel(x_ref, w1_ref, b1_ref, w2_ref, b2_ref, w3_ref, b3_ref, out_ref):
    # fc1 + ReLU  (bf16 MXU inputs, f32 accumulation / activations)
    x = x_ref[...].astype(jnp.bfloat16)
    h1 = jnp.dot(x, w1_ref[...], preferred_element_type=jnp.float32) + b1_ref[...]
    h1 = jnp.maximum(h1, 0.0).astype(jnp.bfloat16)
    # fc2 + ReLU
    h2 = jnp.dot(h1, w2_ref[...], preferred_element_type=jnp.float32) + b2_ref[...]
    h2 = jnp.maximum(h2, 0.0).astype(jnp.bfloat16)
    # fc3 + tanh (f32 path)
    a = jnp.dot(h2, w3_ref[...], preferred_element_type=jnp.float32) + b3_ref[...]
    out_ref[...] = jnp.tanh(a).astype(out_ref.dtype)


def actor_forward(state, packed_params, *, action_dim, block_b=256):
    """Pallas forward. state: (B, state_dim) f32 -> (B, action_dim) f32.

    packed_params: padded params from pad_and_pack (weights bf16, biases f32).
    """
    w1, b1, w2, b2, w3, b3 = packed_params
    B, S = state.shape
    OUT = w3.shape[1]  # padded output width (128)

    # Batch tiling: pad B up to a sublane multiple; tile if larger than block_b.
    B_pad = _round_up(B, 8)
    if B_pad <= block_b:
        TB = B_pad
    else:
        TB = block_b
        B_pad = _round_up(B_pad, TB)
    if B_pad != B:
        state = jnp.pad(state, ((0, B_pad - B), (0, 0)))
    nb = B_pad // TB

    # Weights/biases: constant block index -> fetched once, VMEM-resident.
    resident = lambda arr: pl.BlockSpec(arr.shape, lambda i: (0, 0))

    out_padded = pl.pallas_call(
        actor_kernel,
        out_shape=jax.ShapeDtypeStruct((B_pad, OUT), jnp.float32),
        grid=(nb,),
        in_specs=[
            pl.BlockSpec((TB, S), lambda i: (i, 0)),
            resident(w1), resident(b1),
            resident(w2), resident(b2),
            resident(w3), resident(b3),
        ],
        out_specs=pl.BlockSpec((TB, OUT), lambda i: (i, 0)),
        compiler_params=pltpu.CompilerParams(
            dimension_semantics=("parallel",)),
    )(state, w1, b1, w2, b2, w3, b3)

    return out_padded[:B, :action_dim]


def init_actor_params(key, state_dim, action_dim, h1=H1, h2=H2, eps=0.03):
    """Deterministic init matching the PyTorch module's init scheme (logical shapes).

    fc1/fc2 weights: uniform(-1/sqrt(fan_in), 1/sqrt(fan_in))  [fanin_init]
    fc1/fc2 biases : nn.Linear default uniform(-1/sqrt(fan_in), 1/sqrt(fan_in))
    fc3 weight     : uniform(-eps, eps); fc3 bias: default uniform(-1/sqrt(h2), 1/sqrt(h2))
    Weights are produced as (in_dim, out_dim), i.e. the transpose of torch's (out, in).
    """
    ks = jax.random.split(key, 6)

    def u(k, shape, bound):
        return jax.random.uniform(k, shape, jnp.float32, -bound, bound)

    v1 = 1.0 / np.sqrt(state_dim)
    v2 = 1.0 / np.sqrt(h1)
    v3 = 1.0 / np.sqrt(h2)

    w1 = u(ks[0], (state_dim, h1), v1)
    b1 = u(ks[1], (1, h1), v1)
    w2 = u(ks[2], (h1, h2), v2)
    b2 = u(ks[3], (1, h2), v2)
    w3 = u(ks[4], (h2, action_dim), eps)
    b3 = u(ks[5], (1, action_dim), v3)
    return w1, b1, w2, b2, w3, b3


def pad_and_pack(w1, b1, w2, b2, w3, b3):
    """Zero-pad to 128-aligned dims and cast weights to bf16 (biases stay f32).

    Pad regions are exactly zero, so padded hidden units are ReLU(0+0)=0 and
    padded output columns are tanh(0)=0 -> math identical to the logical net.
    """
    s = w1.shape[0]
    w1p = jnp.zeros((s, H1_PAD), jnp.float32).at[:, :w1.shape[1]].set(w1)
    b1p = jnp.zeros((1, H1_PAD), jnp.float32).at[:, :b1.shape[1]].set(b1)
    w2p = jnp.zeros((H1_PAD, H2_PAD), jnp.float32).at[:w2.shape[0], :w2.shape[1]].set(w2)
    b2p = jnp.zeros((1, H2_PAD), jnp.float32).at[:, :b2.shape[1]].set(b2)
    w3p = jnp.zeros((H2_PAD, OUT_PAD), jnp.float32).at[:w3.shape[0], :w3.shape[1]].set(w3)
    b3p = jnp.zeros((1, OUT_PAD), jnp.float32).at[:, :b3.shape[1]].set(b3)
    return (w1p.astype(jnp.bfloat16), b1p,
            w2p.astype(jnp.bfloat16), b2p,
            w3p.astype(jnp.bfloat16), b3p)


def actor_forward_ref_packed(state, w1, b1, w2, b2, w3, b3):
    """Pure-JAX reference doing exactly the kernel's bf16-in / f32-acc math."""
    x = state.astype(jnp.bfloat16)
    h1 = jnp.dot(x, w1, preferred_element_type=jnp.float32) + b1
    h1 = jnp.maximum(h1, 0.0).astype(jnp.bfloat16)
    h2 = jnp.dot(h1, w2, preferred_element_type=jnp.float32) + b2
    h2 = jnp.maximum(h2, 0.0).astype(jnp.bfloat16)
    return jnp.tanh(jnp.dot(h2, w3, preferred_element_type=jnp.float32) + b3)


def actor_forward_ref_f32(state, w1, b1, w2, b2, w3, b3):
    """Full-precision logical reference (original module semantics)."""
    h = jnp.maximum(state @ w1 + b1, 0.0)
    h = jnp.maximum(h @ w2 + b2, 0.0)
    return jnp.tanh(h @ w3 + b3)


if __name__ == "__main__":
    batch = 8
    state_dim = 32
    action_dim = 8

    key = jax.random.PRNGKey(0)
    k_params, k_state = jax.random.split(key)

    raw_params = init_actor_params(k_params, state_dim, action_dim)
    packed = pad_and_pack(*raw_params)
    state = jax.random.normal(k_state, (batch, state_dim), jnp.float32)

    out = actor_forward(state, packed, action_dim=action_dim)
    out = jax.block_until_ready(out)
    assert out.shape == (batch, action_dim)

    # Exact-math check vs. a pure-JAX reference using the same bf16 weights.
    ref_exact = actor_forward_ref_packed(state, *packed)[:, :action_dim]
    np.testing.assert_allclose(np.asarray(out), np.asarray(ref_exact),
                               atol=1e-4, rtol=1e-4)

    # Semantics check vs. the original full-f32 network (bf16 quantization noise only).
    ref_f32 = actor_forward_ref_f32(state, *raw_params)
    np.testing.assert_allclose(np.asarray(out), np.asarray(ref_f32),
                               atol=1e-2, rtol=1e-2)

    print("KERNEL_OK")
</pallas_src>

<mosaic_0001>
module attributes {stable_mosaic.version = 11 : i64} {
  func.func @actor_kernel(%arg0: i32, %arg1: memref<8x32xf32, #tpu.memory_space<vmem>>, %arg2: memref<32x512xbf16, #tpu.memory_space<vmem>>, %arg3: memref<1x512xf32, #tpu.memory_space<vmem>>, %arg4: memref<512x384xbf16, #tpu.memory_space<vmem>>, %arg5: memref<1x384xf32, #tpu.memory_space<vmem>>, %arg6: memref<384x128xbf16, #tpu.memory_space<vmem>>, %arg7: memref<1x128xf32, #tpu.memory_space<vmem>>, %arg8: memref<8x128xf32, #tpu.memory_space<vmem>>) attributes {dimension_semantics = [#tpu.dimension_semantics<parallel>], iteration_bounds = array<i64: 1>, scalar_prefetch = 0 : i64, scratch_operands = 0 : i64, tpu.core_type = #tpu.core_type<tc>, window_params = [{transform_indices = @transform_0, window_bounds = array<i64: 8, 32>}, {pipeline_mode = #tpu.pipeline_mode<synchronous>, transform_indices = @transform_1, window_bounds = array<i64: 32, 512>}, {pipeline_mode = #tpu.pipeline_mode<synchronous>, transform_indices = @transform_2, window_bounds = array<i64: 1, 512>}, {pipeline_mode = #tpu.pipeline_mode<synchronous>, transform_indices = @transform_3, window_bounds = array<i64: 512, 384>}, {pipeline_mode = #tpu.pipeline_mode<synchronous>, transform_indices = @transform_4, window_bounds = array<i64: 1, 384>}, {pipeline_mode = #tpu.pipeline_mode<synchronous>, transform_indices = @transform_5, window_bounds = array<i64: 384, 128>}, {pipeline_mode = #tpu.pipeline_mode<synchronous>, transform_indices = @transform_6, window_bounds = array<i64: 1, 128>}, {transform_indices = @transform_7, window_bounds = array<i64: 8, 128>}]} {
    %c0 = arith.constant 0 : index
    %c0_0 = arith.constant 0 : index
    %0 = vector.load %arg1[%c0, %c0_0] : memref<8x32xf32, #tpu.memory_space<vmem>>, vector<8x32xf32>
    %1 = arith.truncf %0 : vector<8x32xf32> to vector<8x32xbf16>
    %c0_1 = arith.constant 0 : index
    %c0_2 = arith.constant 0 : index
    %2 = vector.load %arg2[%c0_1, %c0_2] : memref<32x512xbf16, #tpu.memory_space<vmem>>, vector<32x512xbf16>
    %cst = arith.constant dense<0.000000e+00> : vector<8x512xf32>
    %3 = tpu.matmul %1, %2, %cst {dimension_numbers = #tpu.dot_dimension_numbers<[1], [0], [0], [1], [0, 0, 1, 1], [], []>} : vector<8x32xbf16>, vector<32x512xbf16>, vector<8x512xf32> -> vector<8x512xf32>
    %c0_3 = arith.constant 0 : index
    %c0_4 = arith.constant 0 : index
    %4 = vector.load %arg3[%c0_3, %c0_4] : memref<1x512xf32, #tpu.memory_space<vmem>>, vector<1x512xf32>
    %5 = vector.broadcast %4 : vector<1x512xf32> to vector<8x512xf32>
    %6 = arith.addf %3, %5 : vector<8x512xf32>
    %cst_5 = arith.constant 0.000000e+00 : f32
    %7 = vector.broadcast %cst_5 : f32 to vector<8x512xf32>
    %8 = arith.maximumf %6, %7 : vector<8x512xf32>
    %9 = arith.truncf %8 : vector<8x512xf32> to vector<8x512xbf16>
    %c0_6 = arith.constant 0 : index
    %c0_7 = arith.constant 0 : index
    %10 = vector.load %arg4[%c0_6, %c0_7] : memref<512x384xbf16, #tpu.memory_space<vmem>>, vector<512x384xbf16>
    %cst_8 = arith.constant dense<0.000000e+00> : vector<8x384xf32>
    %11 = tpu.matmul %9, %10, %cst_8 {dimension_numbers = #tpu.dot_dimension_numbers<[1], [0], [0], [1], [0, 0, 1, 1], [], []>} : vector<8x512xbf16>, vector<512x384xbf16>, vector<8x384xf32> -> vector<8x384xf32>
    %c0_9 = arith.constant 0 : index
    %c0_10 = arith.constant 0 : index
    %12 = vector.load %arg5[%c0_9, %c0_10] : memref<1x384xf32, #tpu.memory_space<vmem>>, vector<1x384xf32>
    %13 = vector.broadcast %12 : vector<1x384xf32> to vector<8x384xf32>
    %14 = arith.addf %11, %13 : vector<8x384xf32>
    %cst_11 = arith.constant 0.000000e+00 : f32
    %15 = vector.broadcast %cst_11 : f32 to vector<8x384xf32>
    %16 = arith.maximumf %14, %15 : vector<8x384xf32>
    %17 = arith.truncf %16 : vector<8x384xf32> to vector<8x384xbf16>
    %c0_12 = arith.constant 0 : index
    %c0_13 = arith.constant 0 : index
    %18 = vector.load %arg6[%c0_12, %c0_13] : memref<384x128xbf16, #tpu.memory_space<vmem>>, vector<384x128xbf16>
    %cst_14 = arith.constant dense<0.000000e+00> : vector<8x128xf32>
    %19 = tpu.matmul %17, %18, %cst_14 {dimension_numbers = #tpu.dot_dimension_numbers<[1], [0], [0], [1], [0, 0, 1, 1], [], []>} : vector<8x384xbf16>, vector<384x128xbf16>, vector<8x128xf32> -> vector<8x128xf32>
    %c0_15 = arith.constant 0 : index
    %c0_16 = arith.constant 0 : index
    %20 = vector.load %arg7[%c0_15, %c0_16] : memref<1x128xf32, #tpu.memory_space<vmem>>, vector<1x128xf32>
    %21 = vector.broadcast %20 : vector<1x128xf32> to vector<8x128xf32>
    %22 = arith.addf %19, %21 : vector<8x128xf32>
    %23 = math.tanh %22 : vector<8x128xf32>
    %c0_17 = arith.constant 0 : index
    %c0_18 = arith.constant 0 : index
    %24 = vector.load %arg8[%c0_17, %c0_18] : memref<8x128xf32, #tpu.memory_space<vmem>>, vector<8x128xf32>
    tpu.vector_store %arg8[%c0_17, %c0_18], %23 {strides = array<i32>} : memref<8x128xf32, #tpu.memory_space<vmem>>, vector<8x128xf32>,
    return
  }
  func.func @transform_0(%arg0: i32) -> (i32, i32) {
    %c0_i32 = arith.constant 0 : i32
    %c0_i32_0 = arith.constant 0 : i32
    return %arg0, %c0_i32 : i32, i32
  }
  func.func @transform_1(%arg0: i32) -> (i32, i32) {
    %c0_i32 = arith.constant 0 : i32
    %c0_i32_0 = arith.constant 0 : i32
    %c0_i32_1 = arith.constant 0 : i32
    return %c0_i32, %c0_i32_0 : i32, i32
  }
  func.func @transform_2(%arg0: i32) -> (i32, i32) {
    %c0_i32 = arith.constant 0 : i32
    %c0_i32_0 = arith.constant 0 : i32
    %c0_i32_1 = arith.constant 0 : i32
    return %c0_i32, %c0_i32_0 : i32, i32
  }
  func.func @transform_3(%arg0: i32) -> (i32, i32) {
    %c0_i32 = arith.constant 0 : i32
    %c0_i32_0 = arith.constant 0 : i32
    %c0_i32_1 = arith.constant 0 : i32
    return %c0_i32, %c0_i32_0 : i32, i32
  }
  func.func @transform_4(%arg0: i32) -> (i32, i32) {
    %c0_i32 = arith.constant 0 : i32
    %c0_i32_0 = arith.constant 0 : i32
    %c0_i32_1 = arith.constant 0 : i32
    return %c0_i32, %c0_i32_0 : i32, i32
  }
  func.func @transform_5(%arg0: i32) -> (i32, i32) {
    %c0_i32 = arith.constant 0 : i32
    %c0_i32_0 = arith.constant 0 : i32
    %c0_i32_1 = arith.constant 0 : i32
    return %c0_i32, %c0_i32_0 : i32, i32
  }
  func.func @transform_6(%arg0: i32) -> (i32, i32) {
    %c0_i32 = arith.constant 0 : i32
    %c0_i32_0 = arith.constant 0 : i32
    %c0_i32_1 = arith.constant 0 : i32
    return %c0_i32, %c0_i32_0 : i32, i32
  }
  func.func @transform_7(%arg0: i32) -> (i32, i32) {
    %c0_i32 = arith.constant 0 : i32
    %c0_i32_0 = arith.constant 0 : i32
    return %arg0, %c0_i32 : i32, i32
  }
}

</mosaic_0001>

<llo_original>
// kernel: tpu_custom_call.1
$region0: #{tpu_custom_call.1}
  #allocation0 [shape = 'u32[]', space=smem, size = 0x4, offset = 0x4, fixed_abs, tag = 'smem constant byte address 0x4 - core index']
  #allocation1 [shape = 'u32[72,128]{1,0:T(1,128)}', space=vmem, size = 0x9000, scoped, tag = 'internal scratch']
  %s0 = inlined_call_operand.hbm [shape: f32[8,32], index: 0, kind: input, shape index: {}]
  %s1 = inlined_call_operand.hbm [shape: bf16[32,512], index: 1, kind: input, shape index: {}]
  %s2 = inlined_call_operand.hbm [shape: f32[1,512], index: 2, kind: input, shape index: {}]
  %s3 = inlined_call_operand.hbm [shape: bf16[512,384], index: 3, kind: input, shape index: {}]
  %s4 = inlined_call_operand.vmem [shape: f32[1,384], index: 4, kind: input, shape index: {}]
  %s5 = inlined_call_operand.hbm [shape: bf16[384,128], index: 5, kind: input, shape index: {}]
  %s6 = inlined_call_operand.vmem [shape: f32[1,128], index: 6, kind: input, shape index: {}]
  %s7 = inlined_call_operand.hbm [shape: f32[8,128], index: 7, kind: output, shape index: {}]
  %s8 = sld [smem:[#allocation0]]
  $region58: #{tpu_custom_call.1} parent=0
    _
  %s10 = ssub.s32 1, %s8
  %s11 = scalar_select 0, %s10, %s8
  $region1: #{tpu_custom_call.1} parent=0
    #allocation2 [shape = 'u8[4096]{0}', space=vmem, size = 0x1000, scoped, tag = 'input window, operand 0, single buffered']
    #allocation3 [shape = 's32[1]{0}', space=sflag, size = 0x4, scoped, tag = 'scoped memory for tpu_custom_call.1']
    #allocation4 [shape = 's32[1]{0}', space=sflag, size = 0x4, scoped, tag = 'scoped memory for tpu_custom_call.1']
    #allocation5 [shape = 'u8[32768]{0}', space=vmem, size = 0x8000, scoped, tag = 'input window, operand 1, single buffered']
    #allocation6 [shape = 's32[1]{0}', space=sflag, size = 0x4, scoped, tag = 'scoped memory for tpu_custom_call.1']
    #allocation7 [shape = 'u8[2048]{0}', space=vmem, size = 0x800, scoped, tag = 'input window, operand 2, single buffered']
    #allocation8 [shape = 'u8[393216]{0}', space=vmem, size = 0x60000, scoped, tag = 'input window, operand 3, single buffered']
    #allocation9 [shape = 's32[1]{0}', space=sflag, size = 0x4, scoped, tag = 'scoped memory for tpu_custom_call.1']
    #allocation10 [shape = 'u8[98304]{0}', space=vmem, size = 0x18000, scoped, tag = 'input window, operand 5, single buffered']
    #allocation11 [shape = 'u8[4096]{0}', space=vmem, size = 0x1000, scoped, tag = 'output window, operand 0, single buffered']
    %12 = vsyncpa [#allocation3], 0
    %13 = vsyncpa [#allocation6], 0
    %14 = vsyncpa [#allocation9], 0
    %15 = vsyncpa [#allocation4], 0
    // Predicated region
    $region2: #{tpu_custom_call.1} parent=1 // pred_check
      _
    $region3: #{tpu_custom_call.1} parent=1 // pred_check_branch
      %17 = sbr.rel (0) target = $region5
    $region4: #{tpu_custom_call.1} parent=1 // pred_region
      %19 = vsyncadd [#allocation3], 0
      %s21 = sshll.u32 %s0, 4
      %s22 = int_to_ptr.hbm [resolvable:$true] %s21
      %s23 = sshll.u32 [#allocation2], 4
      %s24 = int_to_ptr.vmem [resolvable:$true] %s23
      %26 = dma.hbm_to_vmem [thread:$0]  %s22, 128, %s24, [#allocation3]
    $region5: #{tpu_custom_call.1} parent=1 // pred_fallthru
      _
    // Predicated region
    $region6: #{tpu_custom_call.1} parent=1 // pred_check
      _
    $region7: #{tpu_custom_call.1} parent=1 // pred_check_branch
      %28 = sbr.rel (0) target = $region9
    $region8: #{tpu_custom_call.1} parent=1 // pred_region
      %30 = vsyncadd [#allocation6], 0
      %s31 = sshll.u32 %s1, 4
      %s32 = int_to_ptr.hbm [resolvable:$true] %s31
      %s33 = sshll.u32 [#allocation5], 4
      %s34 = int_to_ptr.vmem [resolvable:$true] %s33
      %39 = dma.hbm_to_vmem [thread:$0]  %s32, 1024, %s34, [#allocation6], 256, 256, 16
    $region9: #{tpu_custom_call.1} parent=1 // pred_fallthru
      _
    // Predicated region
    $region10: #{tpu_custom_call.1} parent=1 // pred_check
      _
    $region11: #{tpu_custom_call.1} parent=1 // pred_check_branch
      %41 = sbr.rel (0) target = $region13
    $region12: #{tpu_custom_call.1} parent=1 // pred_region
      %43 = vsyncadd [#allocation6], 0
      %s45 = sshll.u32 %s2, 4
      %s46 = int_to_ptr.hbm [resolvable:$true] %s45
      %s47 = sshll.u32 [#allocation7], 4
      %s48 = int_to_ptr.vmem [resolvable:$true] %s47
      %50 = dma.hbm_to_vmem [thread:$0]  %s46, 64, %s48, [#allocation6]
    $region13: #{tpu_custom_call.1} parent=1 // pred_fallthru
      _
    // Predicated region
    $region14: #{tpu_custom_call.1} parent=1 // pred_check
      _
    $region15: #{tpu_custom_call.1} parent=1 // pred_check_branch
      %52 = sbr.rel (0) target = $region17
    $region16: #{tpu_custom_call.1} parent=1 // pred_region
      %54 = vsyncadd [#allocation9], 0
      %s55 = sshll.u32 %s3, 4
      %s56 = int_to_ptr.hbm [resolvable:$true] %s55
      %s57 = sshll.u32 [#allocation8], 4
      %s58 = int_to_ptr.vmem [resolvable:$true] %s57
      %63 = dma.hbm_to_vmem [thread:$0]  %s56, 12288, %s58, [#allocation9], 192, 192, 12
    $region17: #{tpu_custom_call.1} parent=1 // pred_fallthru
      _
    // Predicated region
    $region18: #{tpu_custom_call.1} parent=1 // pred_check
      _
    $region19: #{tpu_custom_call.1} parent=1 // pred_check_branch
      %65 = sbr.rel (0) target = $region21
    $region20: #{tpu_custom_call.1} parent=1 // pred_region
      _
    $region21: #{tpu_custom_call.1} parent=1 // pred_fallthru
      _
    // Predicated region
    $region22: #{tpu_custom_call.1} parent=1 // pred_check
      _
    $region23: #{tpu_custom_call.1} parent=1 // pred_check_branch
      %67 = sbr.rel (0) target = $region25
    $region24: #{tpu_custom_call.1} parent=1 // pred_region
      %69 = vsyncadd [#allocation9], 0
      %s70 = sshll.u32 %s5, 4
      %s71 = int_to_ptr.hbm [resolvable:$true] %s70
      %s72 = sshll.u32 [#allocation10], 4
      %s73 = int_to_ptr.vmem [resolvable:$true] %s72
      %78 = dma.hbm_to_vmem [thread:$0]  %s71, 3072, %s73, [#allocation9], 64, 64, 4
    $region25: #{tpu_custom_call.1} parent=1 // pred_fallthru
      _
    // Predicated region
    $region26: #{tpu_custom_call.1} parent=1 // pred_check
      _
    $region27: #{tpu_custom_call.1} parent=1 // pred_check_branch
      %80 = sbr.rel (0) target = $region29
    $region28: #{tpu_custom_call.1} parent=1 // pred_region
      _
    $region29: #{tpu_custom_call.1} parent=1 // pred_fallthru
      _
    // Predicated region
    $region30: #{tpu_custom_call.1} parent=1 // pred_check
      _
    $region31: #{tpu_custom_call.1} parent=1 // pred_check_branch
      %82 = sbr.rel (0) target = $region33
    $region32: #{tpu_custom_call.1} parent=1 // pred_region
      %84 = dma.done [#allocation3], 128
    $region33: #{tpu_custom_call.1} parent=1 // pred_fallthru
      _
    // Predicated region
    $region34: #{tpu_custom_call.1} parent=1 // pred_check
      _
    $region35: #{tpu_custom_call.1} parent=1 // pred_check_branch
      %86 = sbr.rel (0) target = $region37
    $region36: #{tpu_custom_call.1} parent=1 // pred_region
      %88 = dma.done [#allocation6], 1024
    $region37: #{tpu_custom_call.1} parent=1 // pred_fallthru
      _
    // Predicated region
    $region38: #{tpu_custom_call.1} parent=1 // pred_check
      _
    $region39: #{tpu_custom_call.1} parent=1 // pred_check_branch
      %90 = sbr.rel (0) target = $region41
    $region40: #{tpu_custom_call.1} parent=1 // pred_region
      %92 = dma.done [#allocation6], 64
    $region41: #{tpu_custom_call.1} parent=1 // pred_fallthru
      _
    // Predicated region
    $region42: #{tpu_custom_call.1} parent=1 // pred_check
      _
    $region43: #{tpu_custom_call.1} parent=1 // pred_check_branch
      %94 = sbr.rel (0) target = $region45
    $region44: #{tpu_custom_call.1} parent=1 // pred_region
      %96 = dma.done [#allocation9], 12288
    $region45: #{tpu_custom_call.1} parent=1 // pred_fallthru
      _
    // Predicated region
    $region46: #{tpu_custom_call.1} parent=1 // pred_check
      _
    $region47: #{tpu_custom_call.1} parent=1 // pred_check_branch
      %98 = sbr.rel (0) target = $region49
    $region48: #{tpu_custom_call.1} parent=1 // pred_region
      %100 = dma.done [#allocation9], 3072
    $region49: #{tpu_custom_call.1} parent=1 // pred_fallthru
      _
    %v102 = vld [vmem:[#allocation2] sm:$0xff]
    %v103 = vpack.c.bf16 %v102, %v102
    %v104 = vld [vmem:[#allocation5] sm:$0xff]
    %v105 = vld [vmem:[#allocation5 + $0x8] sm:$0xff]
    %v106 = vld [vmem:[#allocation5 + $0x10] sm:$0xff]
    %v107 = vld [vmem:[#allocation5 + $0x18] sm:$0xff]
    %v108 = vld [vmem:[#allocation5 + $0x20] sm:$0xff]
    %v109 = vld [vmem:[#allocation5 + $0x28] sm:$0xff]
    %v110 = vld [vmem:[#allocation5 + $0x30] sm:$0xff]
    %v111 = vld [vmem:[#allocation5 + $0x38] sm:$0xff]
    %v112 = vld [vmem:[#allocation7] sm:$0xf]
    %v114 = vperm.slane %v112, 0
    %v115 = vperm.slane %v112, 1
    %v116 = vperm.slane %v112, 2
    %v117 = vperm.slane %v112, 3
    %v130 = vunpack.c.l.b16 %v104
    %v131 = vunpack.c.h.b16 %v104
    %v132 = vunpack.c.l.b16 %v105
    %v133 = vunpack.c.h.b16 %v105
    %v134 = vunpack.c.l.b16 %v106
    %v135 = vunpack.c.h.b16 %v106
    %v136 = vunpack.c.l.b16 %v107
    %v137 = vunpack.c.h.b16 %v107
    %v138 = vunpack.c.l.b16 %v108
    %v139 = vunpack.c.h.b16 %v108
    %v140 = vunpack.c.l.b16 %v109
    %v141 = vunpack.c.h.b16 %v109
    %v142 = vunpack.c.l.b16 %v110
    %v143 = vunpack.c.h.b16 %v110
    %v144 = vunpack.c.l.b16 %v111
    %v145 = vunpack.c.h.b16 %v111
    %v146 = vpack.c.b16 %v134, %v130
    %v147 = vpack.c.b16 %v135, %v131
    %v148 = vpack.c.b16 %v136, %v132
    %v149 = vpack.c.b16 %v137, %v133
    %v150 = vpack.c.b16 %v142, %v138
    %v151 = vpack.c.b16 %v143, %v139
    %v152 = vpack.c.b16 %v144, %v140
    %v153 = vpack.c.b16 %v145, %v141
    %vm162 = vcmask 261120
    %v164 = vsel %vm162, %v103, 0
    %166 = vmatpush.bf16.msra.mxu0 0
    %167 = vmatpush.bf16.msra.mxu0 0
    %168 = vmatpush.bf16.msra.mxu0 0
    %169 = vmatpush.bf16.msra.mxu0 0
    %170 = vmatpush.bf16.msra.mxu0 0
    %171 = vmatpush.bf16.msra.mxu0 0
    %172 = vmatpush.bf16.msra.mxu0 %v150
    %173 = vmatpush.bf16.msra.mxu0 %v146
    %174 = vmatmul.bf16.gmra.mxu0 %v164
    %v175 = vpop.f32.mrf.mxu0
    %v176 = vadd.f32 %v114, %v175
    %v177 = vpop.f32.mrf.mxu0
    %178 = vdwg.mxu0
    %179 = vmatpush.bf16.msra.mxu0 0
    %180 = vmatpush.bf16.msra.mxu0 0
    %181 = vmatpush.bf16.msra.mxu0 0
    %182 = vmatpush.bf16.msra.mxu0 0
    %183 = vmatpush.bf16.msra.mxu0 0
    %184 = vmatpush.bf16.msra.mxu0 0
    %185 = vmatpush.bf16.msra.mxu0 %v151
    %186 = vmatpush.bf16.msra.mxu0 %v147
    %187 = vmatmul.bf16.gmra.mxu0 %v164
    %v188 = vpop.f32.mrf.mxu0
    %v189 = vadd.f32 %v115, %v188
    %v190 = vpop.f32.mrf.mxu0
    %191 = vdwg.mxu0
    %192 = vmatpush.bf16.msra.mxu0 0
    %193 = vmatpush.bf16.msra.mxu0 0
    %194 = vmatpush.bf16.msra.mxu0 0
    %195 = vmatpush.bf16.msra.mxu0 0
    %196 = vmatpush.bf16.msra.mxu0 0
    %197 = vmatpush.bf16.msra.mxu0 0
    %198 = vmatpush.bf16.msra.mxu0 %v152
    %199 = vmatpush.bf16.msra.mxu0 %v148
    %200 = vmatmul.bf16.gmra.mxu0 %v164
    %v201 = vpop.f32.mrf.mxu0
    %v202 = vadd.f32 %v116, %v201
    %v203 = vpop.f32.mrf.mxu0
    %204 = vdwg.mxu0
    %205 = vmatpush.bf16.msra.mxu0 0
    %206 = vmatpush.bf16.msra.mxu0 0
    %207 = vmatpush.bf16.msra.mxu0 0
    %208 = vmatpush.bf16.msra.mxu0 0
    %209 = vmatpush.bf16.msra.mxu0 0
    %210 = vmatpush.bf16.msra.mxu0 0
    %211 = vmatpush.bf16.msra.mxu0 %v153
    %212 = vmatpush.bf16.msra.mxu0 %v149
    %213 = vmatmul.bf16.gmra.mxu0 %v164
    %v214 = vpop.f32.mrf.mxu0
    %v215 = vadd.f32 %v117, %v214
    %v216 = vpop.f32.mrf.mxu0
    %217 = vdwg.mxu0
    %v218 = vmax.f32 %v176, 0.0
    %v219 = vmax.f32 %v189, 0.0
    %v220 = vmax.f32 %v202, 0.0
    %v221 = vmax.f32 %v215, 0.0
    %v222 = vpack.c.bf16 %v218, %v218
    %v223 = vpack.c.bf16 %v219, %v219
    %v224 = vpack.c.bf16 %v220, %v220
    %v225 = vpack.c.bf16 %v221, %v221
    %v226 = vld [vmem:[#allocation8] sm:$0xff]
    %v227 = vld [vmem:[#allocation8 + $0x8] sm:$0xf]
    %v228 = vld [vmem:[#allocation8 + $0xc] sm:$0xff]
    %v229 = vld [vmem:[#allocation8 + $0x14] sm:$0xf]
    %v230 = vld [vmem:[#allocation8 + $0x18] sm:$0xff]
    %v231 = vld [vmem:[#allocation8 + $0x20] sm:$0xf]
    %v232 = vld [vmem:[#allocation8 + $0x24] sm:$0xff]
    %v233 = vld [vmem:[#allocation8 + $0x2c] sm:$0xf]
    %v234 = vld [vmem:[#allocation8 + $0x30] sm:$0xff]
    %v235 = vld [vmem:[#allocation8 + $0x38] sm:$0xf]
    %v236 = vld [vmem:[#allocation8 + $0x3c] sm:$0xff]
    %v237 = vld [vmem:[#allocation8 + $0x44] sm:$0xf]
    %v238 = vld [vmem:[#allocation8 + $0x48] sm:$0xff]
    %v239 = vld [vmem:[#allocation8 + $0x50] sm:$0xf]
    %v240 = vld [vmem:[#allocation8 + $0x54] sm:$0xff]
    %v241 = vld [vmem:[#allocation8 + $0x5c] sm:$0xf]
    %v242 = vld [vmem:[#allocation8 + $0x60] sm:$0xff]
    %v243 = vld [vmem:[#allocation8 + $0x68] sm:$0xf]
    %v244 = vld [vmem:[#allocation8 + $0x6c] sm:$0xff]
    %v245 = vld [vmem:[#allocation8 + $0x74] sm:$0xf]
    %v246 = vld [vmem:[#allocation8 + $0x78] sm:$0xff]
    %v247 = vld [vmem:[#allocation8 + $0x80] sm:$0xf]
    %v248 = vld [vmem:[#allocation8 + $0x84] sm:$0xff]
    %v249 = vld [vmem:[#allocation8 + $0x8c] sm:$0xf]
    %v250 = vld [vmem:[#allocation8 + $0x90] sm:$0xff]
    %v251 = vld [vmem:[#allocation8 + $0x98] sm:$0xf]
    %v252 = vld [vmem:[#allocation8 + $0x9c] sm:$0xff]
    %v253 = vld [vmem:[#allocation8 + $0xa4] sm:$0xf]
    %v254 = vld [vmem:[#allocation8 + $0xa8] sm:$0xff]
    %v255 = vld [vmem:[#allocation8 + $0xb0] sm:$0xf]
    %v256 = vld [vmem:[#allocation8 + $0xb4] sm:$0xff]
    %v257 = vld [vmem:[#allocation8 + $0xbc] sm:$0xf]
    %v258 = vld [vmem:[#allocation8 + $0xc0] sm:$0xff]
    %v259 = vld [vmem:[#allocation8 + $0xc8] sm:$0xf]
    %v260 = vld [vmem:[#allocation8 + $0xcc] sm:$0xff]
    %v261 = vld [vmem:[#allocation8 + $0xd4] sm:$0xf]
    %v262 = vld [vmem:[#allocation8 + $0xd8] sm:$0xff]
    %v263 = vld [vmem:[#allocation8 + $0xe0] sm:$0xf]
    %v264 = vld [vmem:[#allocation8 + $0xe4] sm:$0xff]
    %v265 = vld [vmem:[#allocation8 + $0xec] sm:$0xf]
    %v266 = vld [vmem:[#allocation8 + $0xf0] sm:$0xff]
    %v267 = vld [vmem:[#allocation8 + $0xf8] sm:$0xf]
    %v268 = vld [vmem:[#allocation8 + $0xfc] sm:$0xff]
    %v269 = vld [vmem:[#allocation8 + $0x104] sm:$0xf]
    %v270 = vld [vmem:[#allocation8 + $0x108] sm:$0xff]
    %v271 = vld [vmem:[#allocation8 + $0x110] sm:$0xf]
    %v272 = vld [vmem:[#allocation8 + $0x114] sm:$0xff]
    %v273 = vld [vmem:[#allocation8 + $0x11c] sm:$0xf]
    %v274 = vld [vmem:[#allocation8 + $0x120] sm:$0xff]
    %v275 = vld [vmem:[#allocation8 + $0x128] sm:$0xf]
    %v276 = vld [vmem:[#allocation8 + $0x12c] sm:$0xff]
    %v277 = vld [vmem:[#allocation8 + $0x134] sm:$0xf]
    %v278 = vld [vmem:[#allocation8 + $0x138] sm:$0xff]
    %v279 = vld [vmem:[#allocation8 + $0x140] sm:$0xf]
    %v280 = vld [vmem:[#allocation8 + $0x144] sm:$0xff]
    %v281 = vld [vmem:[#allocation8 + $0x14c] sm:$0xf]
    %v282 = vld [vmem:[#allocation8 + $0x150] sm:$0xff]
    %v283 = vld [vmem:[#allocation8 + $0x158] sm:$0xf]
    %v284 = vld [vmem:[#allocation8 + $0x15c] sm:$0xff]
    %v285 = vld [vmem:[#allocation8 + $0x164] sm:$0xf]
    %v286 = vld [vmem:[#allocation8 + $0x168] sm:$0xff]
    %v287 = vld [vmem:[#allocation8 + $0x170] sm:$0xf]
    %v288 = vld [vmem:[#allocation8 + $0x174] sm:$0xff]
    %v289 = vld [vmem:[#allocation8 + $0x17c] sm:$0xf]
    %v290 = vld [vmem:[#allocation8 + $0x180] sm:$0xff]
    %v291 = vld [vmem:[#allocation8 + $0x188] sm:$0xf]
    %v292 = vld [vmem:[#allocation8 + $0x18c] sm:$0xff]
    %v293 = vld [vmem:[#allocation8 + $0x194] sm:$0xf]
    %v294 = vld [vmem:[#allocation8 + $0x198] sm:$0xff]
    %v295 = vld [vmem:[#allocation8 + $0x1a0] sm:$0xf]
    %v296 = vld [vmem:[#allocation8 + $0x1a4] sm:$0xff]
    %v297 = vld [vmem:[#allocation8 + $0x1ac] sm:$0xf]
    %v298 = vld [vmem:[#allocation8 + $0x1b0] sm:$0xff]
    %v299 = vld [vmem:[#allocation8 + $0x1b8] sm:$0xf]
    %v300 = vld [vmem:[#allocation8 + $0x1bc] sm:$0xff]
    %v301 = vld [vmem:[#allocation8 + $0x1c4] sm:$0xf]
    %v302 = vld [vmem:[#allocation8 + $0x1c8] sm:$0xff]
    %v303 = vld [vmem:[#allocation8 + $0x1d0] sm:$0xf]
    %v304 = vld [vmem:[#allocation8 + $0x1d4] sm:$0xff]
    %v305 = vld [vmem:[#allocation8 + $0x1dc] sm:$0xf]
    %v306 = vld [vmem:[#allocation8 + $0x1e0] sm:$0xff]
    %v307 = vld [vmem:[#allocation8 + $0x1e8] sm:$0xf]
    %v308 = vld [vmem:[#allocation8 + $0x1ec] sm:$0xff]
    %v309 = vld [vmem:[#allocation8 + $0x1f4] sm:$0xf]
    %v310 = vld [vmem:[#allocation8 + $0x1f8] sm:$0xff]
    %v311 = vld [vmem:[#allocation8 + $0x200] sm:$0xf]
    %v312 = vld [vmem:[#allocation8 + $0x204] sm:$0xff]
    %v313 = vld [vmem:[#allocation8 + $0x20c] sm:$0xf]
    %v314 = vld [vmem:[#allocation8 + $0x210] sm:$0xff]
    %v315 = vld [vmem:[#allocation8 + $0x218] sm:$0xf]
    %v316 = vld [vmem:[#allocation8 + $0x21c] sm:$0xff]
    %v317 = vld [vmem:[#allocation8 + $0x224] sm:$0xf]
    %v318 = vld [vmem:[#allocation8 + $0x228] sm:$0xff]
    %v319 = vld [vmem:[#allocation8 + $0x230] sm:$0xf]
    %v320 = vld [vmem:[#allocation8 + $0x234] sm:$0xff]
    %v321 = vld [vmem:[#allocation8 + $0x23c] sm:$0xf]
    %v322 = vld [vmem:[#allocation8 + $0x240] sm:$0xff]
    %v323 = vld [vmem:[#allocation8 + $0x248] sm:$0xf]
    %v324 = vld [vmem:[#allocation8 + $0x24c] sm:$0xff]
    %v325 = vld [vmem:[#allocation8 + $0x254] sm:$0xf]
    %v326 = vld [vmem:[#allocation8 + $0x258] sm:$0xff]
    %v327 = vld [vmem:[#allocation8 + $0x260] sm:$0xf]
    %v328 = vld [vmem:[#allocation8 + $0x264] sm:$0xff]
    %v329 = vld [vmem:[#allocation8 + $0x26c] sm:$0xf]
    %v330 = vld [vmem:[#allocation8 + $0x270] sm:$0xff]
    %v331 = vld [vmem:[#allocation8 + $0x278] sm:$0xf]
    %v332 = vld [vmem:[#allocation8 + $0x27c] sm:$0xff]
    %v333 = vld [vmem:[#allocation8 + $0x284] sm:$0xf]
    %v334 = vld [vmem:[#allocation8 + $0x288] sm:$0xff]
    %v335 = vld [vmem:[#allocation8 + $0x290] sm:$0xf]
    %v336 = vld [vmem:[#allocation8 + $0x294] sm:$0xff]
    %v337 = vld [vmem:[#allocation8 + $0x29c] sm:$0xf]
    %v338 = vld [vmem:[#allocation8 + $0x2a0] sm:$0xff]
    %v339 = vld [vmem:[#allocation8 + $0x2a8] sm:$0xf]
    %v340 = vld [vmem:[#allocation8 + $0x2ac] sm:$0xff]
    %v341 = vld [vmem:[#allocation8 + $0x2b4] sm:$0xf]
    %v342 = vld [vmem:[#allocation8 + $0x2b8] sm:$0xff]
    %v343 = vld [vmem:[#allocation8 + $0x2c0] sm:$0xf]
    %v344 = vld [vmem:[#allocation8 + $0x2c4] sm:$0xff]
    %v345 = vld [vmem:[#allocation8 + $0x2cc] sm:$0xf]
    %v346 = vld [vmem:[#allocation8 + $0x2d0] sm:$0xff]
    %v347 = vld [vmem:[#allocation8 + $0x2d8] sm:$0xf]
    %v348 = vld [vmem:[#allocation8 + $0x2dc] sm:$0xff]
    %v349 = vld [vmem:[#allocation8 + $0x2e4] sm:$0xf]
    %v350 = vld [vmem:[#allocation8 + $0x2e8] sm:$0xff]
    %v351 = vld [vmem:[#allocation8 + $0x2f0] sm:$0xf]
    %v352 = vld [vmem:[#allocation8 + $0x2f4] sm:$0xff]
    %v353 = vld [vmem:[#allocation8 + $0x2fc] sm:$0xf]
    %v354 = vld [vmem:[%s4] sm:$0x7]
    %v356 = vperm.slane %v354, 0
    %v357 = vperm.slane %v354, 1
    %v358 = vperm.slane %v354, 2
    %v490 = vunpack.c.l.b16 %v226
    %v491 = vunpack.c.h.b16 %v226
    %v492 = vunpack.c.l.b16 %v227
    %v493 = vunpack.c.l.b16 %v228
    %v494 = vunpack.c.h.b16 %v228
    %v495 = vunpack.c.l.b16 %v229
    %v496 = vunpack.c.l.b16 %v230
    %v497 = vunpack.c.h.b16 %v230
    %v498 = vunpack.c.l.b16 %v231
    %v499 = vunpack.c.l.b16 %v232
    %v500 = vunpack.c.h.b16 %v232
    %v501 = vunpack.c.l.b16 %v233
    %v502 = vunpack.c.l.b16 %v234
    %v503 = vunpack.c.h.b16 %v234
    %v504 = vunpack.c.l.b16 %v235
    %v505 = vunpack.c.l.b16 %v236
    %v506 = vunpack.c.h.b16 %v236
    %v507 = vunpack.c.l.b16 %v237
    %v508 = vunpack.c.l.b16 %v238
    %v509 = vunpack.c.h.b16 %v238
    %v510 = vunpack.c.l.b16 %v239
    %v511 = vunpack.c.l.b16 %v240
    %v512 = vunpack.c.h.b16 %v240
    %v513 = vunpack.c.l.b16 %v241
    %v514 = vunpack.c.l.b16 %v242
    %v515 = vunpack.c.h.b16 %v242
    %v516 = vunpack.c.l.b16 %v243
    %v517 = vunpack.c.l.b16 %v244
    %v518 = vunpack.c.h.b16 %v244
    %v519 = vunpack.c.l.b16 %v245
    %v520 = vunpack.c.l.b16 %v246
    %v521 = vunpack.c.h.b16 %v246
    %v522 = vunpack.c.l.b16 %v247
    %v523 = vunpack.c.l.b16 %v248
    %v524 = vunpack.c.h.b16 %v248
    %v525 = vunpack.c.l.b16 %v249
    %v526 = vunpack.c.l.b16 %v250
    %v527 = vunpack.c.h.b16 %v250
    %v528 = vunpack.c.l.b16 %v251
    %v529 = vunpack.c.l.b16 %v252
    %v530 = vunpack.c.h.b16 %v252
    %v531 = vunpack.c.l.b16 %v253
    %v532 = vunpack.c.l.b16 %v254
    %v533 = vunpack.c.h.b16 %v254
    %v534 = vunpack.c.l.b16 %v255
    %v535 = vunpack.c.l.b16 %v256
    %v536 = vunpack.c.h.b16 %v256
    %v537 = vunpack.c.l.b16 %v257
    %v538 = vunpack.c.l.b16 %v258
    %v539 = vunpack.c.h.b16 %v258
    %v540 = vunpack.c.l.b16 %v259
    %v541 = vunpack.c.l.b16 %v260
    %v542 = vunpack.c.h.b16 %v260
    %v543 = vunpack.c.l.b16 %v261
    %v544 = vunpack.c.l.b16 %v262
    %v545 = vunpack.c.h.b16 %v262
    %v546 = vunpack.c.l.b16 %v263
    %v547 = vunpack.c.l.b16 %v264
    %v548 = vunpack.c.h.b16 %v264
    %v549 = vunpack.c.l.b16 %v265
    %v550 = vunpack.c.l.b16 %v266
    %v551 = vunpack.c.h.b16 %v266
    %v552 = vunpack.c.l.b16 %v267
    %v553 = vunpack.c.l.b16 %v268
    %v554 = vunpack.c.h.b16 %v268
    %v555 = vunpack.c.l.b16 %v269
    %v556 = vunpack.c.l.b16 %v270
    %v557 = vunpack.c.h.b16 %v270
    %v558 = vunpack.c.l.b16 %v271
    %v559 = vunpack.c.l.b16 %v272
    %v560 = vunpack.c.h.b16 %v272
    %v561 = vunpack.c.l.b16 %v273
    %v562 = vunpack.c.l.b16 %v274
    %v563 = vunpack.c.h.b16 %v274
    %v564 = vunpack.c.l.b16 %v275
    %v565 = vunpack.c.l.b16 %v276
    %v566 = vunpack.c.h.b16 %v276
    %v567 = vunpack.c.l.b16 %v277
    %v568 = vunpack.c.l.b16 %v278
    %v569 = vunpack.c.h.b16 %v278
    %v570 = vunpack.c.l.b16 %v279
    %v571 = vunpack.c.l.b16 %v280
    %v572 = vunpack.c.h.b16 %v280
    %v573 = vunpack.c.l.b16 %v281
    %v574 = vunpack.c.l.b16 %v282
    %v575 = vunpack.c.h.b16 %v282
    %v576 = vunpack.c.l.b16 %v283
    %v577 = vunpack.c.l.b16 %v284
    %v578 = vunpack.c.h.b16 %v284
    %v579 = vunpack.c.l.b16 %v285
    %v580 = vunpack.c.l.b16 %v286
    %v581 = vunpack.c.h.b16 %v286
    %v582 = vunpack.c.l.b16 %v287
    %v583 = vunpack.c.l.b16 %v288
    %v584 = vunpack.c.h.b16 %v288
    %v585 = vunpack.c.l.b16 %v289
    %v586 = vunpack.c.l.b16 %v290
    %v587 = vunpack.c.h.b16 %v290
    %v588 = vunpack.c.l.b16 %v291
    %v589 = vunpack.c.l.b16 %v292
    %v590 = vunpack.c.h.b16 %v292
    %v591 = vunpack.c.l.b16 %v293
    %v592 = vunpack.c.l.b16 %v294
    %v593 = vunpack.c.h.b16 %v294
    %v594 = vunpack.c.l.b16 %v295
    %v595 = vunpack.c.l.b16 %v296
    %v596 = vunpack.c.h.b16 %v296
    %v597 = vunpack.c.l.b16 %v297
    %v598 = vunpack.c.l.b16 %v298
    %v599 = vunpack.c.h.b16 %v298
    %v600 = vunpack.c.l.b16 %v299
    %v601 = vunpack.c.l.b16 %v300
    %v602 = vunpack.c.h.b16 %v300
    %v603 = vunpack.c.l.b16 %v301
    %v604 = vunpack.c.l.b16 %v302
    %v605 = vunpack.c.h.b16 %v302
    %v606 = vunpack.c.l.b16 %v303
    %v607 = vunpack.c.l.b16 %v304
    %v608 = vunpack.c.h.b16 %v304
    %v609 = vunpack.c.l.b16 %v305
    %v610 = vunpack.c.l.b16 %v306
    %v611 = vunpack.c.h.b16 %v306
    %v612 = vunpack.c.l.b16 %v307
    %v613 = vunpack.c.l.b16 %v308
    %v614 = vunpack.c.h.b16 %v308
    %v615 = vunpack.c.l.b16 %v309
    %v616 = vunpack.c.l.b16 %v310
    %v617 = vunpack.c.h.b16 %v310
    %v618 = vunpack.c.l.b16 %v311
    %v619 = vunpack.c.l.b16 %v312
    %v620 = vunpack.c.h.b16 %v312
    %v621 = vunpack.c.l.b16 %v313
    %v622 = vunpack.c.l.b16 %v314
    %v623 = vunpack.c.h.b16 %v314
    %v624 = vunpack.c.l.b16 %v315
    %v625 = vunpack.c.l.b16 %v316
    %v626 = vunpack.c.h.b16 %v316
    %v627 = vunpack.c.l.b16 %v317
    %v628 = vunpack.c.l.b16 %v318
    %v629 = vunpack.c.h.b16 %v318
    %v630 = vunpack.c.l.b16 %v319
    %v631 = vunpack.c.l.b16 %v320
    %v632 = vunpack.c.h.b16 %v320
    %v633 = vunpack.c.l.b16 %v321
    %v634 = vunpack.c.l.b16 %v322
    %v635 = vunpack.c.h.b16 %v322
    %v636 = vunpack.c.l.b16 %v323
    %v637 = vunpack.c.l.b16 %v324
    %v638 = vunpack.c.h.b16 %v324
    %v639 = vunpack.c.l.b16 %v325
    %v640 = vunpack.c.l.b16 %v326
    %v641 = vunpack.c.h.b16 %v326
    %v642 = vunpack.c.l.b16 %v327
    %v643 = vunpack.c.l.b16 %v328
    %v644 = vunpack.c.h.b16 %v328
    %v645 = vunpack.c.l.b16 %v329
    %v646 = vunpack.c.l.b16 %v330
    %v647 = vunpack.c.h.b16 %v330
    %v648 = vunpack.c.l.b16 %v331
    %v649 = vunpack.c.l.b16 %v332
    %v650 = vunpack.c.h.b16 %v332
    %v651 = vunpack.c.l.b16 %v333
    %v652 = vunpack.c.l.b16 %v334
    %v653 = vunpack.c.h.b16 %v334
    %v654 = vunpack.c.l.b16 %v335
    %v655 = vunpack.c.l.b16 %v336
    %v656 = vunpack.c.h.b16 %v336
    %v657 = vunpack.c.l.b16 %v337
    %v658 = vunpack.c.l.b16 %v338
    %v659 = vunpack.c.h.b16 %v338
    %v660 = vunpack.c.l.b16 %v339
    %v661 = vunpack.c.l.b16 %v340
    %v662 = vunpack.c.h.b16 %v340
    %v663 = vunpack.c.l.b16 %v341
    %v664 = vunpack.c.l.b16 %v342
    %v665 = vunpack.c.h.b16 %v342
    %v666 = vunpack.c.l.b16 %v343
    %v667 = vunpack.c.l.b16 %v344
    %v668 = vunpack.c.h.b16 %v344
    %v669 = vunpack.c.l.b16 %v345
    %v670 = vunpack.c.l.b16 %v346
    %v671 = vunpack.c.h.b16 %v346
    %v672 = vunpack.c.l.b16 %v347
    %v673 = vunpack.c.l.b16 %v348
    %v674 = vunpack.c.h.b16 %v348
    %v675 = vunpack.c.l.b16 %v349
    %v676 = vunpack.c.l.b16 %v350
    %v677 = vunpack.c.h.b16 %v350
    %v678 = vunpack.c.l.b16 %v351
    %v679 = vunpack.c.l.b16 %v352
    %v680 = vunpack.c.h.b16 %v352
    %v681 = vunpack.c.l.b16 %v353
    %v682 = vpack.c.b16 %v493, %v490
    %v683 = vpack.c.b16 %v494, %v491
    %v684 = vpack.c.b16 %v495, %v492
    %v685 = vpack.c.b16 %v499, %v496
    %v686 = vpack.c.b16 %v500, %v497
    %v687 = vpack.c.b16 %v501, %v498
    %v688 = vpack.c.b16 %v505, %v502
    %v689 = vpack.c.b16 %v506, %v503
    %v690 = vpack.c.b16 %v507, %v504
    %v691 = vpack.c.b16 %v511, %v508
    %v692 = vpack.c.b16 %v512, %v509
    %v693 = vpack.c.b16 %v513, %v510
    %v694 = vpack.c.b16 %v517, %v514
    %v695 = vpack.c.b16 %v518, %v515
    %v696 = vpack.c.b16 %v519, %v516
    %v697 = vpack.c.b16 %v523, %v520
    %v698 = vpack.c.b16 %v524, %v521
    %v699 = vpack.c.b16 %v525, %v522
    %v700 = vpack.c.b16 %v529, %v526
    %v701 = vpack.c.b16 %v530, %v527
    %v702 = vpack.c.b16 %v531, %v528
    %v703 = vpack.c.b16 %v535, %v532
    %v704 = vpack.c.b16 %v536, %v533
    %v705 = vpack.c.b16 %v537, %v534
    %v706 = vpack.c.b16 %v541, %v538
    %v707 = vpack.c.b16 %v542, %v539
    %v708 = vpack.c.b16 %v543, %v540
    %v709 = vpack.c.b16 %v547, %v544
    %v710 = vpack.c.b16 %v548, %v545
    %v711 = vpack.c.b16 %v549, %v546
    %v712 = vpack.c.b16 %v553, %v550
    %v713 = vpack.c.b16 %v554, %v551
    %v714 = vpack.c.b16 %v555, %v552
    %v715 = vpack.c.b16 %v559, %v556
    %v716 = vpack.c.b16 %v560, %v557
    %v717 = vpack.c.b16 %v561, %v558
    %v718 = vpack.c.b16 %v565, %v562
    %v719 = vpack.c.b16 %v566, %v563
    %v720 = vpack.c.b16 %v567, %v564
    %v721 = vpack.c.b16 %v571, %v568
    %v722 = vpack.c.b16 %v572, %v569
    %v723 = vpack.c.b16 %v573, %v570
    %v724 = vpack.c.b16 %v577, %v574
    %v725 = vpack.c.b16 %v578, %v575
    %v726 = vpack.c.b16 %v579, %v576
    %v727 = vpack.c.b16 %v583, %v580
    %v728 = vpack.c.b16 %v584, %v581
    %v729 = vpack.c.b16 %v585, %v582
    %v730 = vpack.c.b16 %v589, %v586
    %v731 = vpack.c.b16 %v590, %v587
    %v732 = vpack.c.b16 %v591, %v588
    %v733 = vpack.c.b16 %v595, %v592
    %v734 = vpack.c.b16 %v596, %v593
    %v735 = vpack.c.b16 %v597, %v594
    %v736 = vpack.c.b16 %v601, %v598
    %v737 = vpack.c.b16 %v602, %v599
    %v738 = vpack.c.b16 %v603, %v600
    %v739 = vpack.c.b16 %v607, %v604
    %v740 = vpack.c.b16 %v608, %v605
    %v741 = vpack.c.b16 %v609, %v606
    %v742 = vpack.c.b16 %v613, %v610
    %v743 = vpack.c.b16 %v614, %v611
    %v744 = vpack.c.b16 %v615, %v612
    %v745 = vpack.c.b16 %v619, %v616
    %v746 = vpack.c.b16 %v620, %v617
    %v747 = vpack.c.b16 %v621, %v618
    %v748 = vpack.c.b16 %v625, %v622
    %v749 = vpack.c.b16 %v626, %v623
    %v750 = vpack.c.b16 %v627, %v624
    %v751 = vpack.c.b16 %v631, %v628
    %v752 = vpack.c.b16 %v632, %v629
    %v753 = vpack.c.b16 %v633, %v630
    %v754 = vpack.c.b16 %v637, %v634
    %v755 = vpack.c.b16 %v638, %v635
    %v756 = vpack.c.b16 %v639, %v636
    %v757 = vpack.c.b16 %v643, %v640
    %v758 = vpack.c.b16 %v644, %v641
    %v759 = vpack.c.b16 %v645, %v642
    %v760 = vpack.c.b16 %v649, %v646
    %v761 = vpack.c.b16 %v650, %v647
    %v762 = vpack.c.b16 %v651, %v648
    %v763 = vpack.c.b16 %v655, %v652
    %v764 = vpack.c.b16 %v656, %v653
    %v765 = vpack.c.b16 %v657, %v654
    %v766 = vpack.c.b16 %v661, %v658
    %v767 = vpack.c.b16 %v662, %v659
    %v768 = vpack.c.b16 %v663, %v660
    %v769 = vpack.c.b16 %v667, %v664
    %v770 = vpack.c.b16 %v668, %v665
    %v771 = vpack.c.b16 %v669, %v666
    %v772 = vpack.c.b16 %v673, %v670
    %v773 = vpack.c.b16 %v674, %v671
    %v774 = vpack.c.b16 %v675, %v672
    %v775 = vpack.c.b16 %v679, %v676
    %v776 = vpack.c.b16 %v680, %v677
    %v777 = vpack.c.b16 %v681, %v678
    %874 = vmatpush.bf16.msra.mxu0 %v703
    %875 = vmatpush.bf16.msra.mxu0 %v700
    %876 = vmatpush.bf16.msra.mxu0 %v697
    %877 = vmatpush.bf16.msra.mxu0 %v694
    %878 = vmatpush.bf16.msra.mxu0 %v691
    %879 = vmatpush.bf16.msra.mxu0 %v688
    %880 = vmatpush.bf16.msra.mxu0 %v685
    %881 = vmatpush.bf16.msra.mxu0 %v682
    %882 = vmatmul.bf16.gmra.mxu0 %v222
    %v883 = vpop.f32.mrf.mxu0
    %v884 = vadd.f32 %v356, %v883
    %v885 = vpop.f32.mrf.mxu0
    %886 = vdwg.mxu0
    %887 = vmatpush.bf16.msra.mxu0 %v727
    %888 = vmatpush.bf16.msra.mxu0 %v724
    %889 = vmatpush.bf16.msra.mxu0 %v721
    %890 = vmatpush.bf16.msra.mxu0 %v718
    %891 = vmatpush.bf16.msra.mxu0 %v715
    %892 = vmatpush.bf16.msra.mxu0 %v712
    %893 = vmatpush.bf16.msra.mxu0 %v709
    %894 = vmatpush.bf16.msra.mxu0 %v706
    %895 = vmatmul.bf16.gmra.mxu0 %v223
    %v896 = vpop.f32.mrf.mxu0
    %v897 = vadd.f32 %v884, %v896
    %v898 = vpop.f32.mrf.mxu0
    %899 = vdwg.mxu0
    %900 = vmatpush.bf16.msra.mxu0 %v751
    %901 = vmatpush.bf16.msra.mxu0 %v748
    %902 = vmatpush.bf16.msra.mxu0 %v745
    %903 = vmatpush.bf16.msra.mxu0 %v742
    %904 = vmatpush.bf16.msra.mxu0 %v739
    %905 = vmatpush.bf16.msra.mxu0 %v736
    %906 = vmatpush.bf16.msra.mxu0 %v733
    %907 = vmatpush.bf16.msra.mxu0 %v730
    %908 = vmatmul.bf16.gmra.mxu0 %v224
    %v909 = vpop.f32.mrf.mxu0
    %v910 = vadd.f32 %v897, %v909
    %v911 = vpop.f32.mrf.mxu0
    %912 = vdwg.mxu0
    %913 = vmatpush.bf16.msra.mxu0 %v775
    %914 = vmatpush.bf16.msra.mxu0 %v772
    %915 = vmatpush.bf16.msra.mxu0 %v769
    %916 = vmatpush.bf16.msra.mxu0 %v766
    %917 = vmatpush.bf16.msra.mxu0 %v763
    %918 = vmatpush.bf16.msra.mxu0 %v760
    %919 = vmatpush.bf16.msra.mxu0 %v757
    %920 = vmatpush.bf16.msra.mxu0 %v754
    %921 = vmatmul.bf16.gmra.mxu0 %v225
    %v922 = vpop.f32.mrf.mxu0
    %v923 = vadd.f32 %v910, %v922
    %v924 = vpop.f32.mrf.mxu0
    %925 = vdwg.mxu0
    %926 = vmatpush.bf16.msra.mxu0 %v704
    %927 = vmatpush.bf16.msra.mxu0 %v701
    %928 = vmatpush.bf16.msra.mxu0 %v698
    %929 = vmatpush.bf16.msra.mxu0 %v695
    %930 = vmatpush.bf16.msra.mxu0 %v692
    %931 = vmatpush.bf16.msra.mxu0 %v689
    %932 = vmatpush.bf16.msra.mxu0 %v686
    %933 = vmatpush.bf16.msra.mxu0 %v683
    %934 = vmatmul.bf16.gmra.mxu0 %v222
    %v935 = vpop.f32.mrf.mxu0
    %v936 = vadd.f32 %v357, %v935
    %v937 = vpop.f32.mrf.mxu0
    %938 = vdwg.mxu0
    %939 = vmatpush.bf16.msra.mxu0 %v728
    %940 = vmatpush.bf16.msra.mxu0 %v725
    %941 = vmatpush.bf16.msra.mxu0 %v722
    %942 = vmatpush.bf16.msra.mxu0 %v719
    %943 = vmatpush.bf16.msra.mxu0 %v716
    %944 = vmatpush.bf16.msra.mxu0 %v713
    %945 = vmatpush.bf16.msra.mxu0 %v710
    %946 = vmatpush.bf16.msra.mxu0 %v707
    %947 = vmatmul.bf16.gmra.mxu0 %v223
    %v948 = vpop.f32.mrf.mxu0
    %v949 = vadd.f32 %v936, %v948
    %v950 = vpop.f32.mrf.mxu0
    %951 = vdwg.mxu0
    %952 = vmatpush.bf16.msra.mxu0 %v752
    %953 = vmatpush.bf16.msra.mxu0 %v749
    %954 = vmatpush.bf16.msra.mxu0 %v746
    %955 = vmatpush.bf16.msra.mxu0 %v743
    %956 = vmatpush.bf16.msra.mxu0 %v740
    %957 = vmatpush.bf16.msra.mxu0 %v737
    %958 = vmatpush.bf16.msra.mxu0 %v734
    %959 = vmatpush.bf16.msra.mxu0 %v731
    %960 = vmatmul.bf16.gmra.mxu0 %v224
    %v961 = vpop.f32.mrf.mxu0
    %v962 = vadd.f32 %v949, %v961
    %v963 = vpop.f32.mrf.mxu0
    %964 = vdwg.mxu0
    %965 = vmatpush.bf16.msra.mxu0 %v776
    %966 = vmatpush.bf16.msra.mxu0 %v773
    %967 = vmatpush.bf16.msra.mxu0 %v770
    %968 = vmatpush.bf16.msra.mxu0 %v767
    %969 = vmatpush.bf16.msra.mxu0 %v764
    %970 = vmatpush.bf16.msra.mxu0 %v761
    %971 = vmatpush.bf16.msra.mxu0 %v758
    %972 = vmatpush.bf16.msra.mxu0 %v755
    %973 = vmatmul.bf16.gmra.mxu0 %v225
    %v974 = vpop.f32.mrf.mxu0
    %v975 = vadd.f32 %v962, %v974
    %v976 = vpop.f32.mrf.mxu0
    %977 = vdwg.mxu0
    %978 = vmatpush.bf16.msra.mxu0 %v705
    %979 = vmatpush.bf16.msra.mxu0 %v702
    %980 = vmatpush.bf16.msra.mxu0 %v699
    %981 = vmatpush.bf16.msra.mxu0 %v696
    %982 = vmatpush.bf16.msra.mxu0 %v693
    %983 = vmatpush.bf16.msra.mxu0 %v690
    %984 = vmatpush.bf16.msra.mxu0 %v687
    %985 = vmatpush.bf16.msra.mxu0 %v684
    %986 = vmatmul.bf16.gmra.mxu0 %v222
    %v987 = vpop.f32.mrf.mxu0
    %v988 = vadd.f32 %v358, %v987
    %v989 = vpop.f32.mrf.mxu0
    %990 = vdwg.mxu0
    %991 = vmatpush.bf16.msra.mxu0 %v729
    %992 = vmatpush.bf16.msra.mxu0 %v726
    %993 = vmatpush.bf16.msra.mxu0 %v723
    %994 = vmatpush.bf16.msra.mxu0 %v720
    %995 = vmatpush.bf16.msra.mxu0 %v717
    %996 = vmatpush.bf16.msra.mxu0 %v714
    %997 = vmatpush.bf16.msra.mxu0 %v711
    %998 = vmatpush.bf16.msra.mxu0 %v708
    %999 = vmatmul.bf16.gmra.mxu0 %v223
    %v1000 = vpop.f32.mrf.mxu0
    %v1001 = vadd.f32 %v988, %v1000
    %v1002 = vpop.f32.mrf.mxu0
    %1003 = vdwg.mxu0
    %1004 = vmatpush.bf16.msra.mxu0 %v753
    %1005 = vmatpush.bf16.msra.mxu0 %v750
    %1006 = vmatpush.bf16.msra.mxu0 %v747
    %1007 = vmatpush.bf16.msra.mxu0 %v744
    %1008 = vmatpush.bf16.msra.mxu0 %v741
    %1009 = vmatpush.bf16.msra.mxu0 %v738
    %1010 = vmatpush.bf16.msra.mxu0 %v735
    %1011 = vmatpush.bf16.msra.mxu0 %v732
    %1012 = vmatmul.bf16.gmra.mxu0 %v224
    %v1013 = vpop.f32.mrf.mxu0
    %v1014 = vadd.f32 %v1001, %v1013
    %v1015 = vpop.f32.mrf.mxu0
    %1016 = vdwg.mxu0
    %1017 = vmatpush.bf16.msra.mxu0 %v777
    %1018 = vmatpush.bf16.msra.mxu0 %v774
    %1019 = vmatpush.bf16.msra.mxu0 %v771
    %1020 = vmatpush.bf16.msra.mxu0 %v768
    %1021 = vmatpush.bf16.msra.mxu0 %v765
    %1022 = vmatpush.bf16.msra.mxu0 %v762
    %1023 = vmatpush.bf16.msra.mxu0 %v759
    %1024 = vmatpush.bf16.msra.mxu0 %v756
    %1025 = vmatmul.bf16.gmra.mxu0 %v225
    %v1026 = vpop.f32.mrf.mxu0
    %v1027 = vadd.f32 %v1014, %v1026
    %v1028 = vpop.f32.mrf.mxu0
    %1029 = vdwg.mxu0
    %v1030 = vmax.f32 %v923, 0.0
    %v1031 = vmax.f32 %v975, 0.0
    %v1032 = vmax.f32 %v1027, 0.0
    %v1033 = vpack.c.bf16 %v1030, %v1030
    %v1034 = vpack.c.bf16 %v1031, %v1031
    %v1035 = vpack.c.bf16 %v1032, %v1032
    %v1036 = vld [vmem:[#allocation10] sm:$0xf]
    %v1037 = vld [vmem:[#allocation10 + $0x4] sm:$0xf]
    %v1038 = vld [vmem:[#allocation10 + $0x8] sm:$0xf]
    %v1039 = vld [vmem:[#allocation10 + $0xc] sm:$0xf]
    %v1040 = vld [vmem:[#allocation10 + $0x10] sm:$0xf]
    %v1041 = vld [vmem:[#allocation10 + $0x14] sm:$0xf]
    %v1042 = vld [vmem:[#allocation10 + $0x18] sm:$0xf]
    %v1043 = vld [vmem:[#allocation10 + $0x1c] sm:$0xf]
    %v1044 = vld [vmem:[#allocation10 + $0x20] sm:$0xf]
    %v1045 = vld [vmem:[#allocation10 + $0x24] sm:$0xf]
    %v1046 = vld [vmem:[#allocation10 + $0x28] sm:$0xf]
    %v1047 = vld [vmem:[#allocation10 + $0x2c] sm:$0xf]
    %v1048 = vld [vmem:[#allocation10 + $0x30] sm:$0xf]
    %v1049 = vld [vmem:[#allocation10 + $0x34] sm:$0xf]
    %v1050 = vld [vmem:[#allocation10 + $0x38] sm:$0xf]
    %v1051 = vld [vmem:[#allocation10 + $0x3c] sm:$0xf]
    %v1052 = vld [vmem:[#allocation10 + $0x40] sm:$0xf]
    %v1053 = vld [vmem:[#allocation10 + $0x44] sm:$0xf]
    %v1054 = vld [vmem:[#allocation10 + $0x48] sm:$0xf]
    %v1055 = vld [vmem:[#allocation10 + $0x4c] sm:$0xf]
    %v1056 = vld [vmem:[#allocation10 + $0x50] sm:$0xf]
    %v1057 = vld [vmem:[#allocation10 + $0x54] sm:$0xf]
    %v1058 = vld [vmem:[#allocation10 + $0x58] sm:$0xf]
    %v1059 = vld [vmem:[#allocation10 + $0x5c] sm:$0xf]
    %v1060 = vld [vmem:[#allocation10 + $0x60] sm:$0xf]
    %v1061 = vld [vmem:[#allocation10 + $0x64] sm:$0xf]
    %v1062 = vld [vmem:[#allocation10 + $0x68] sm:$0xf]
    %v1063 = vld [vmem:[#allocation10 + $0x6c] sm:$0xf]
    %v1064 = vld [vmem:[#allocation10 + $0x70] sm:$0xf]
    %v1065 = vld [vmem:[#allocation10 + $0x74] sm:$0xf]
    %v1066 = vld [vmem:[#allocation10 + $0x78] sm:$0xf]
    %v1067 = vld [vmem:[#allocation10 + $0x7c] sm:$0xf]
    %v1068 = vld [vmem:[#allocation10 + $0x80] sm:$0xf]
    %v1069 = vld [vmem:[#allocation10 + $0x84] sm:$0xf]
    %v1070 = vld [vmem:[#allocation10 + $0x88] sm:$0xf]
    %v1071 = vld [vmem:[#allocation10 + $0x8c] sm:$0xf]
    %v1072 = vld [vmem:[#allocation10 + $0x90] sm:$0xf]
    %v1073 = vld [vmem:[#allocation10 + $0x94] sm:$0xf]
    %v1074 = vld [vmem:[#allocation10 + $0x98] sm:$0xf]
    %v1075 = vld [vmem:[#allocation10 + $0x9c] sm:$0xf]
    %v1076 = vld [vmem:[#allocation10 + $0xa0] sm:$0xf]
    %v1077 = vld [vmem:[#allocation10 + $0xa4] sm:$0xf]
    %v1078 = vld [vmem:[#allocation10 + $0xa8] sm:$0xf]
    %v1079 = vld [vmem:[#allocation10 + $0xac] sm:$0xf]
    %v1080 = vld [vmem:[#allocation10 + $0xb0] sm:$0xf]
    %v1081 = vld [vmem:[#allocation10 + $0xb4] sm:$0xf]
    %v1082 = vld [vmem:[#allocation10 + $0xb8] sm:$0xf]
    %v1083 = vld [vmem:[#allocation10 + $0xbc] sm:$0xf]
    %v1084 = vld [vmem:[%s6] sm:$0x1]
    %v1086 = vperm.slane %v1084, 0
    %v1136 = vunpack.c.l.b16 %v1036
    %v1137 = vunpack.c.l.b16 %v1037
    %v1138 = vunpack.c.l.b16 %v1038
    %v1139 = vunpack.c.l.b16 %v1039
    %v1140 = vunpack.c.l.b16 %v1040
    %v1141 = vunpack.c.l.b16 %v1041
    %v1142 = vunpack.c.l.b16 %v1042
    %v1143 = vunpack.c.l.b16 %v1043
    %v1144 = vunpack.c.l.b16 %v1044
    %v1145 = vunpack.c.l.b16 %v1045
    %v1146 = vunpack.c.l.b16 %v1046
    %v1147 = vunpack.c.l.b16 %v1047
    %v1148 = vunpack.c.l.b16 %v1048
    %v1149 = vunpack.c.l.b16 %v1049
    %v1150 = vunpack.c.l.b16 %v1050
    %v1151 = vunpack.c.l.b16 %v1051
    %v1152 = vunpack.c.l.b16 %v1052
    %v1153 = vunpack.c.l.b16 %v1053
    %v1154 = vunpack.c.l.b16 %v1054
    %v1155 = vunpack.c.l.b16 %v1055
    %v1156 = vunpack.c.l.b16 %v1056
    %v1157 = vunpack.c.l.b16 %v1057
    %v1158 = vunpack.c.l.b16 %v1058
    %v1159 = vunpack.c.l.b16 %v1059
    %v1160 = vunpack.c.l.b16 %v1060
    %v1161 = vunpack.c.l.b16 %v1061
    %v1162 = vunpack.c.l.b16 %v1062
    %v1163 = vunpack.c.l.b16 %v1063
    %v1164 = vunpack.c.l.b16 %v1064
    %v1165 = vunpack.c.l.b16 %v1065
    %v1166 = vunpack.c.l.b16 %v1066
    %v1167 = vunpack.c.l.b16 %v1067
    %v1168 = vunpack.c.l.b16 %v1068
    %v1169 = vunpack.c.l.b16 %v1069
    %v1170 = vunpack.c.l.b16 %v1070
    %v1171 = vunpack.c.l.b16 %v1071
    %v1172 = vunpack.c.l.b16 %v1072
    %v1173 = vunpack.c.l.b16 %v1073
    %v1174 = vunpack.c.l.b16 %v1074
    %v1175 = vunpack.c.l.b16 %v1075
    %v1176 = vunpack.c.l.b16 %v1076
    %v1177 = vunpack.c.l.b16 %v1077
    %v1178 = vunpack.c.l.b16 %v1078
    %v1179 = vunpack.c.l.b16 %v1079
    %v1180 = vunpack.c.l.b16 %v1080
    %v1181 = vunpack.c.l.b16 %v1081
    %v1182 = vunpack.c.l.b16 %v1082
    %v1183 = vunpack.c.l.b16 %v1083
    %v1184 = vpack.c.b16 %v1137, %v1136
    %v1185 = vpack.c.b16 %v1139, %v1138
    %v1186 = vpack.c.b16 %v1141, %v1140
    %v1187 = vpack.c.b16 %v1143, %v1142
    %v1188 = vpack.c.b16 %v1145, %v1144
    %v1189 = vpack.c.b16 %v1147, %v1146
    %v1190 = vpack.c.b16 %v1149, %v1148
    %v1191 = vpack.c.b16 %v1151, %v1150
    %v1192 = vpack.c.b16 %v1153, %v1152
    %v1193 = vpack.c.b16 %v1155, %v1154
    %v1194 = vpack.c.b16 %v1157, %v1156
    %v1195 = vpack.c.b16 %v1159, %v1158
    %v1196 = vpack.c.b16 %v1161, %v1160
    %v1197 = vpack.c.b16 %v1163, %v1162
    %v1198 = vpack.c.b16 %v1165, %v1164
    %v1199 = vpack.c.b16 %v1167, %v1166
    %v1200 = vpack.c.b16 %v1169, %v1168
    %v1201 = vpack.c.b16 %v1171, %v1170
    %v1202 = vpack.c.b16 %v1173, %v1172
    %v1203 = vpack.c.b16 %v1175, %v1174
    %v1204 = vpack.c.b16 %v1177, %v1176
    %v1205 = vpack.c.b16 %v1179, %v1178
    %v1206 = vpack.c.b16 %v1181, %v1180
    %v1207 = vpack.c.b16 %v1183, %v1182
    %1232 = vmatpush.bf16.msra.mxu0 %v1191
    %1233 = vmatpush.bf16.msra.mxu0 %v1190
    %1234 = vmatpush.bf16.msra.mxu0 %v1189
    %1235 = vmatpush.bf16.msra.mxu0 %v1188
    %1236 = vmatpush.bf16.msra.mxu0 %v1187
    %1237 = vmatpush.bf16.msra.mxu0 %v1186
    %1238 = vmatpush.bf16.msra.mxu0 %v1185
    %1239 = vmatpush.bf16.msra.mxu0 %v1184
    %1240 = vmatmul.bf16.gmra.mxu0 %v1033
    %v1241 = vpop.f32.mrf.mxu0
    %v1242 = vadd.f32 %v1086, %v1241
    %v1243 = vpop.f32.mrf.mxu0
    %1244 = vdwg.mxu0
    %1245 = vmatpush.bf16.msra.mxu0 %v1199
    %1246 = vmatpush.bf16.msra.mxu0 %v1198
    %1247 = vmatpush.bf16.msra.mxu0 %v1197
    %1248 = vmatpush.bf16.msra.mxu0 %v1196
    %1249 = vmatpush.bf16.msra.mxu0 %v1195
    %1250 = vmatpush.bf16.msra.mxu0 %v1194
    %1251 = vmatpush.bf16.msra.mxu0 %v1193
    %1252 = vmatpush.bf16.msra.mxu0 %v1192
    %1253 = vmatmul.bf16.gmra.mxu0 %v1034
    %v1254 = vpop.f32.mrf.mxu0
    %v1255 = vadd.f32 %v1242, %v1254
    %v1256 = vpop.f32.mrf.mxu0
    %1257 = vdwg.mxu0
    %1258 = vmatpush.bf16.msra.mxu0 %v1207
    %1259 = vmatpush.bf16.msra.mxu0 %v1206
    %1260 = vmatpush.bf16.msra.mxu0 %v1205
    %1261 = vmatpush.bf16.msra.mxu0 %v1204
    %1262 = vmatpush.bf16.msra.mxu0 %v1203
    %1263 = vmatpush.bf16.msra.mxu0 %v1202
    %1264 = vmatpush.bf16.msra.mxu0 %v1201
    %1265 = vmatpush.bf16.msra.mxu0 %v1200
    %1266 = vmatmul.bf16.gmra.mxu0 %v1035
    %v1267 = vpop.f32.mrf.mxu0
    %v1268 = vadd.f32 %v1255, %v1267
    %v1269 = vpop.f32.mrf.mxu0
    %1270 = vdwg.mxu0
    %v1271 = vtanh.pop %v1268
    %1272 = vst [vmem:[#allocation11] sm:$0xff] %v1271
    // Predicated region
    $region50: #{tpu_custom_call.1} parent=1 // pred_check
      _
    $region51: #{tpu_custom_call.1} parent=1 // pred_check_branch
      %1274 = sbr.rel (0) target = $region53
    $region52: #{tpu_custom_call.1} parent=1 // pred_region
      %1276 = vsyncadd [#allocation4], 0
      %s1278 = sshll.u32 [#allocation11], 4
      %s1279 = int_to_ptr.vmem [resolvable:$true] %s1278
      %s1280 = sshll.u32 %s7, 4
      %s1281 = int_to_ptr.hbm [resolvable:$true] %s1280
      %1283 = dma.vmem_to_hbm [thread:$0]  %s1279, 128, %s1281, [#allocation4]
    $region53: #{tpu_custom_call.1} parent=1 // pred_fallthru
      _
    // Predicated region
    $region54: #{tpu_custom_call.1} parent=1 // pred_check
      _
    $region55: #{tpu_custom_call.1} parent=1 // pred_check_branch
      %1285 = sbr.rel (0) target = $region57
    $region56: #{tpu_custom_call.1} parent=1 // pred_region
      %1287 = dma.done [#allocation4], 128
    $region57: #{tpu_custom_call.1} parent=1 // pred_fallthru
      _
    %1288 = vsyncpa [#allocation3], 1
    %1289 = vsyncpa [#allocation6], 1
    %1290 = vsyncpa [#allocation9], 1
    %1291 = vsyncpa [#allocation4], 1

</llo_original>
